<compile_context>
chip_gen: v5e
topology: v5e:2x2
jax: 0.10.0
libtpu: 0.0.40
codegen_flags: <defaults>
</compile_context>

<pallas_src>
import jax
import jax.numpy as jnp
import numpy as np
from jax import lax
from jax.experimental import pallas as pl
from jax.experimental.pallas import tpu as pltpu


_CLIP_LO = 1e-4
_CLIP_HI = 1.0 - 1e-4
_MAX_LANE_WIDTH = 4096                      # search cap for an exact multiple-of-128 fold
_DEFAULT_LANE_WIDTH = 2048                  # lane width when the fold needs padding
_TARGET_BLOCK_BYTES = 2 * 1024 * 1024       # ~2 MiB/input block (~85%+ of HBM roofline)
_VMEM_LIMIT_BYTES = 32 * 1024 * 1024        # 3 inputs x 2 buffers x 2 MiB << 32 MiB << 64 MiB
_NUM_CORE_SPLITS = 2                        # leading "parallel" grid axis (v7x megacore)


def _round_up(x, m):
    return ((x + m - 1) // m) * m


def _choose_lane_width(n_elems):
    """Largest multiple-of-128 divisor of n_elems (<= cap); else a padded width."""
    for lanes in range(_MAX_LANE_WIDTH, 127, -128):
        if n_elems % lanes == 0:
            return lanes, False
    return min(_DEFAULT_LANE_WIDTH, _round_up(n_elems, 128)), True


def _choose_tile_rows(n_rows, lane_width, max_itemsize):
    """Rows per block targeting ~2 MiB per input block (sublane-aligned)."""
    if n_rows < 8:
        return n_rows                        # full-dim block (allowed by Mosaic)
    quantum = 16 if n_rows >= 16 else 8      # 16 keeps bf16 (16,128) tiles whole
    bytes_per_row = lane_width * max_itemsize
    t = max(quantum, (_TARGET_BLOCK_BYTES // bytes_per_row) // quantum * quantum)
    return min(t, (n_rows // quantum) * quantum)


def _make_kernel(*, tile_rows, lane_width, n_valid, blocks_per_core,
                 can_overhang, inv_count):
    """Build the tiled ELR+ forward kernel body."""
    acc_groups = tile_rows // 8 if tile_rows % 8 == 0 else None

    def kernel(x_ref, y_ref, q_ref, loss_ref, reg_ref, loss_acc, reg_acc):
        core = pl.program_id(0)              # "parallel" axis (megacore split)
        step = pl.program_id(1)              # "arbitrary" reduction axis

        @pl.when(step == 0)
        def _init():
            loss_acc[...] = jnp.zeros_like(loss_acc)
            reg_acc[...] = jnp.zeros_like(reg_acc)

        x = x_ref[...].astype(jnp.float32)   # logits
        y = y_ref[...].astype(jnp.float32)   # multi-hot labels
        q = q_ref[...].astype(jnp.float32)   # ELR target

        # One shared exp feeds both softplus and the sigmoid (EUP is scarce):
        #   e = exp(-|x|); softplus(x) = max(x,0) + log1p(e)
        #   sigmoid(x) = 1/(1+e) for x>=0, e/(1+e) for x<0 (no cancellation).
        e = jnp.exp(-jnp.abs(x))
        sp = jnp.maximum(x, 0.0) + jnp.log1p(e)
        # MultiLabelSoftMarginLoss per element collapses to softplus(x) - y*x.
        loss_elem = sp - y * x

        r = pl.reciprocal(1.0 + e, approx=False)  # approx=True only after tol check
        y_pred = jnp.clip(r * jnp.where(x >= 0.0, 1.0, e), _CLIP_LO, _CLIP_HI)
        reg_elem = jnp.log1p(-q * y_pred)

        def accumulate(l_e, r_e):
            if acc_groups is not None:
                # Layout-preserving sublane split -> pure VALU vreg adds.
                l_e = l_e.reshape(acc_groups, 8, lane_width).sum(axis=0)
                r_e = r_e.reshape(acc_groups, 8, lane_width).sum(axis=0)
            loss_acc[...] += l_e
            reg_acc[...] += r_e

        if can_overhang:
            row_block = core * blocks_per_core + step        # unclamped block id
            is_partial = (row_block + 1) * tile_rows * lane_width > n_valid

            @pl.when(jnp.logical_not(is_partial))
            def _full():
                accumulate(loss_elem, reg_elem)

            @pl.when(is_partial)
            def _tail():
                shape = (tile_rows, lane_width)
                rows = row_block * tile_rows + lax.broadcasted_iota(jnp.int32, shape, 0)
                cols = lax.broadcasted_iota(jnp.int32, shape, 1)
                valid = rows * lane_width + cols < n_valid
                accumulate(jnp.where(valid, loss_elem, 0.0),
                           jnp.where(valid, reg_elem, 0.0))
        else:
            accumulate(loss_elem, reg_elem)

        @pl.when(step == pl.num_programs(1) - 1)
        def _finalize():
            loss_ref[...] = (jnp.sum(loss_acc[...], keepdims=True)
                             * inv_count).reshape(1, 1, 1)
            reg_ref[...] = (jnp.sum(reg_acc[...], keepdims=True)
                            * inv_count).reshape(1, 1, 1)

    return kernel


def elr_plus_forward(output, label, q):
    """Returns (loss, reg) scalars, matching ELR_Plus.forward(index, output, label)."""
    B, C = output.shape
    assert label.shape == (B, C) and q.shape == (B, C)
    n_elems = B * C

    lane_width, needs_pad = _choose_lane_width(n_elems)
    n_rows = pl.cdiv(n_elems, lane_width)
    padded_elems = n_rows * lane_width

    def fold(a):
        # Copy-free reshape for contiguous row-major inputs; the pad copy only
        # triggers when B*C has no multiple-of-128 divisor.
        flat = a.reshape(-1)
        if needs_pad:
            flat = jnp.pad(flat, (0, padded_elems - n_elems))
        return flat.reshape(n_rows, lane_width)

    x2, y2, q2 = fold(output), fold(label), fold(q)

    max_itemsize = max(a.dtype.itemsize for a in (x2, y2, q2))
    tile_rows = _choose_tile_rows(n_rows, lane_width, max_itemsize)
    total_row_blocks = pl.cdiv(n_rows, tile_rows)
    blocks_per_core = pl.cdiv(total_row_blocks, _NUM_CORE_SPLITS)
    covered_elems = _NUM_CORE_SPLITS * blocks_per_core * tile_rows * lane_width
    can_overhang = covered_elems != n_elems
    inv_count = 1.0 / float(n_elems)

    kernel = _make_kernel(
        tile_rows=tile_rows, lane_width=lane_width, n_valid=n_elems,
        blocks_per_core=blocks_per_core, can_overhang=can_overhang,
        inv_count=inv_count)

    last_block = total_row_blocks - 1

    def in_map(c, i):
        # Clamp so phantom blocks (from the 2-way split / row overhang) re-read
        # the last real block; their contribution is masked to zero in-kernel.
        return (jnp.minimum(c * blocks_per_core + i, last_block), 0)

    in_spec = pl.BlockSpec((tile_rows, lane_width), in_map)
    out_spec = pl.BlockSpec((1, 1, 1), lambda c, i: (c, 0, 0))

    acc_rows = 8 if tile_rows % 8 == 0 else tile_rows

    bytes_accessed = sum(a.size * a.dtype.itemsize for a in (x2, y2, q2)) \
        + 2 * _NUM_CORE_SPLITS * 4
    cost = pl.CostEstimate(flops=16 * n_elems, transcendentals=4 * n_elems,
                           bytes_accessed=bytes_accessed)

    loss_parts, reg_parts = pl.pallas_call(
        kernel,
        out_shape=(
            jax.ShapeDtypeStruct((_NUM_CORE_SPLITS, 1, 1), jnp.float32),
            jax.ShapeDtypeStruct((_NUM_CORE_SPLITS, 1, 1), jnp.float32),
        ),
        grid_spec=pltpu.PrefetchScalarGridSpec(
            num_scalar_prefetch=0,
            grid=(_NUM_CORE_SPLITS, blocks_per_core),
            in_specs=[in_spec, in_spec, in_spec],
            out_specs=(out_spec, out_spec),
            scratch_shapes=[
                pltpu.VMEM((acc_rows, lane_width), jnp.float32),  # loss partials
                pltpu.VMEM((acc_rows, lane_width), jnp.float32),  # reg partials
            ],
        ),
        compiler_params=pltpu.CompilerParams(
            dimension_semantics=("parallel", "arbitrary"),
            vmem_limit_bytes=_VMEM_LIMIT_BYTES,
        ),
        cost_estimate=cost,
    )(x2, y2, q2)

    return jnp.sum(loss_parts), jnp.sum(reg_parts)


class ELRPlusJax:
    """JAX port of ELR_Plus; the forward hot path is the Pallas kernel above.

    pred_hist / q are stored in bf16 so the HBM-bandwidth-bound kernel reads
    roughly half the bytes; the kernel widens to f32 in-register.
    """

    def __init__(self, num_examp, num_classes=15, beta=0.7, target_dtype=jnp.bfloat16):
        self.pred_hist = jnp.zeros((num_examp, num_classes), target_dtype)
        self.beta = beta
        self.q = None

    def update_hist(self, out, index, mix_index, lamb):
        # TODO(synk): stateful EMA scatter/gather bookkeeping (not part of the
        # forward hot path) stays in plain JAX.
        y_pred_ = jax.nn.sigmoid(out.astype(jnp.float32))
        hist = self.pred_hist[index].astype(jnp.float32)
        new_rows = self.beta * hist + (1.0 - self.beta) * y_pred_
        self.pred_hist = self.pred_hist.at[index].set(
            new_rows.astype(self.pred_hist.dtype))
        hist_idx = self.pred_hist[index].astype(jnp.float32)
        q = lamb * hist_idx + (1.0 - lamb) * hist_idx[mix_index]
        self.q = q.astype(self.pred_hist.dtype)

    def forward(self, index, output, label):
        return elr_plus_forward(output, label, self.q)

    def get_target(self, index=None):
        return self.pred_hist if index is None else self.pred_hist[index]

    def set_target(self, target):
        self.pred_hist = target


def _reference_forward(output, label, q):
    x = output.astype(jnp.float32)
    y = label.astype(jnp.float32)
    qf = q.astype(jnp.float32)
    log_sig = -jnp.logaddexp(-x, 0.0)
    log_1m = -jnp.logaddexp(x, 0.0)
    loss = -jnp.mean(y * log_sig + (1.0 - y) * log_1m)
    y_pred = jnp.clip(jax.nn.sigmoid(x), _CLIP_LO, _CLIP_HI)
    reg = jnp.mean(jnp.log(1.0 - qf * y_pred))
    return loss, reg


if __name__ == "__main__":
    key = jax.random.PRNGKey(0)
    k1, k2, k3 = jax.random.split(key, 3)

    B, C, NUM_EXAMP = 8, 15, 32
    # Compact HBM dtypes (bf16) per the bandwidth guidance; the kernel widens
    # to f32 in-register.
    output = jax.random.normal(k1, (B, C), jnp.float32).astype(jnp.bfloat16)
    label = (jax.random.uniform(k2, (B, C)) > 0.5).astype(jnp.bfloat16)
    index = jnp.arange(B, dtype=jnp.int32)
    mix_index = jax.random.permutation(k3, B)
    lamb = 0.5

    elr = ELRPlusJax(NUM_EXAMP, num_classes=C, beta=0.7)
    elr.update_hist(output, index, mix_index, lamb)

    loss, reg = elr.forward(index, output, label)
    loss = jax.block_until_ready(loss)
    reg = jax.block_until_ready(reg)

    ref_loss, ref_reg = _reference_forward(output, label, elr.q)
    np.testing.assert_allclose(np.asarray(loss), np.asarray(ref_loss), rtol=1e-5, atol=1e-5)
    np.testing.assert_allclose(np.asarray(reg), np.asarray(ref_reg), rtol=1e-5, atol=1e-5)

    print("KERNEL_OK")
</pallas_src>

<mosaic_0001>
module attributes {stable_mosaic.version = 11 : i64} {
  func.func @kernel(%arg0: i32, %arg1: i32, %arg2: memref<1x128xbf16, #tpu.memory_space<vmem>>, %arg3: memref<1x128xbf16, #tpu.memory_space<vmem>>, %arg4: memref<1x128xbf16, #tpu.memory_space<vmem>>, %arg5: memref<1x1x1xf32, #tpu.memory_space<vmem>>, %arg6: memref<1x1x1xf32, #tpu.memory_space<vmem>>, %arg7: memref<1x128xf32, #tpu.memory_space<vmem>>, %arg8: memref<1x128xf32, #tpu.memory_space<vmem>>) attributes {dimension_semantics = [#tpu.dimension_semantics<parallel>, #tpu.dimension_semantics<arbitrary>], iteration_bounds = array<i64: 2, 1>, scalar_prefetch = 0 : i64, scratch_operands = 2 : i64, tpu.core_type = #tpu.core_type<tc>, window_params = [{transform_indices = @transform_0, window_bounds = array<i64: 1, 128>}, {transform_indices = @transform_1, window_bounds = array<i64: 1, 128>}, {transform_indices = @transform_2, window_bounds = array<i64: 1, 128>}, {transform_indices = @transform_3, window_bounds = array<i64: 1, 1, 1>}, {transform_indices = @transform_4, window_bounds = array<i64: 1, 1, 1>}]} {
    %c0_i32 = arith.constant 0 : i32
    %0 = arith.cmpi eq, %arg1, %c0_i32 : i32
    %1 = arith.extui %0 : i1 to i32
    %c0_i32_0 = arith.constant 0 : i32
    %2 = arith.cmpi ne, %1, %c0_i32_0 : i32
    scf.if %2 {
      %cst_19 = arith.constant 0.000000e+00 : f32
      %49 = vector.broadcast %cst_19 : f32 to vector<1x128xf32>
      %c0_20 = arith.constant 0 : index
      %c0_21 = arith.constant 0 : index
      %50 = vector.load %arg7[%c0_20, %c0_21] : memref<1x128xf32, #tpu.memory_space<vmem>>, vector<1x128xf32>
      tpu.vector_store %arg7[%c0_20, %c0_21], %49 {strides = array<i32>} : memref<1x128xf32, #tpu.memory_space<vmem>>, vector<1x128xf32>,
      %cst_22 = arith.constant 0.000000e+00 : f32
      %51 = vector.broadcast %cst_22 : f32 to vector<1x128xf32>
      %c0_23 = arith.constant 0 : index
      %c0_24 = arith.constant 0 : index
      %52 = vector.load %arg8[%c0_23, %c0_24] : memref<1x128xf32, #tpu.memory_space<vmem>>, vector<1x128xf32>
      tpu.vector_store %arg8[%c0_23, %c0_24], %51 {strides = array<i32>} : memref<1x128xf32, #tpu.memory_space<vmem>>, vector<1x128xf32>,
    } else {
    }
    %c0 = arith.constant 0 : index
    %c0_1 = arith.constant 0 : index
    %3 = vector.load %arg2[%c0, %c0_1] : memref<1x128xbf16, #tpu.memory_space<vmem>>, vector<1x128xbf16>
    %4 = arith.extf %3 : vector<1x128xbf16> to vector<1x128xf32>
    %c0_2 = arith.constant 0 : index
    %c0_3 = arith.constant 0 : index
    %5 = vector.load %arg3[%c0_2, %c0_3] : memref<1x128xbf16, #tpu.memory_space<vmem>>, vector<1x128xbf16>
    %6 = arith.extf %5 : vector<1x128xbf16> to vector<1x128xf32>
    %c0_4 = arith.constant 0 : index
    %c0_5 = arith.constant 0 : index
    %7 = vector.load %arg4[%c0_4, %c0_5] : memref<1x128xbf16, #tpu.memory_space<vmem>>, vector<1x128xbf16>
    %8 = arith.extf %7 : vector<1x128xbf16> to vector<1x128xf32>
    %9 = math.absf %4 : vector<1x128xf32>
    %cst = arith.constant 0.000000e+00 : f32
    %10 = vector.broadcast %cst : f32 to vector<1x128xf32>
    %11 = arith.subf %10, %9 : vector<1x128xf32>
    %12 = math.exp %11 : vector<1x128xf32>
    %cst_6 = arith.constant 0.000000e+00 : f32
    %13 = vector.broadcast %cst_6 : f32 to vector<1x128xf32>
    %14 = arith.maximumf %4, %13 : vector<1x128xf32>
    %15 = math.log1p %12 : vector<1x128xf32>
    %16 = arith.addf %14, %15 : vector<1x128xf32>
    %17 = arith.mulf %6, %4 : vector<1x128xf32>
    %18 = arith.subf %16, %17 : vector<1x128xf32>
    %cst_7 = arith.constant 1.000000e+00 : f32
    %19 = vector.broadcast %cst_7 : f32 to vector<1x128xf32>
    %20 = arith.addf %19, %12 : vector<1x128xf32>
    %21 = tpu.reciprocal %20 : vector<1x128xf32> -> vector<1x128xf32>
    %cst_8 = arith.constant 0.000000e+00 : f32
    %22 = vector.broadcast %cst_8 : f32 to vector<1x128xf32>
    %23 = arith.cmpf oge, %4, %22 : vector<1x128xf32>
    %cst_9 = arith.constant 1.000000e+00 : f32
    %24 = vector.broadcast %cst_9 : f32 to vector<1x128xf32>
    %25 = arith.select %23, %24, %12 : vector<1x128xi1>, vector<1x128xf32>
    %26 = arith.mulf %21, %25 : vector<1x128xf32>
    %cst_10 = arith.constant 9.99999974E-5 : f32
    %cst_11 = arith.constant 0.999899983 : f32
    %27 = vector.broadcast %cst_10 : f32 to vector<1x128xf32>
    %28 = arith.maximumf %27, %26 : vector<1x128xf32>
    %29 = vector.broadcast %cst_11 : f32 to vector<1x128xf32>
    %30 = arith.minimumf %29, %28 : vector<1x128xf32>
    %cst_12 = arith.constant 0.000000e+00 : f32
    %31 = vector.broadcast %cst_12 : f32 to vector<1x128xf32>
    %32 = arith.subf %31, %8 : vector<1x128xf32>
    %33 = arith.mulf %32, %30 : vector<1x128xf32>
    %34 = math.log1p %33 : vector<1x128xf32>
    %c1_i32 = arith.constant 1 : i32
    %35 = arith.muli %arg0, %c1_i32 : i32
    %36 = arith.addi %35, %arg1 : i32
    %c1_i32_13 = arith.constant 1 : i32
    %37 = arith.addi %36, %c1_i32_13 : i32
    %c1_i32_14 = arith.constant 1 : i32
    %38 = arith.muli %37, %c1_i32_14 : i32
    %c128_i32 = arith.constant 128 : i32
    %39 = arith.muli %38, %c128_i32 : i32
    %c120_i32 = arith.constant 120 : i32
    %40 = arith.cmpi sgt, %39, %c120_i32 : i32
    %true = arith.constant true
    %41 = arith.xori %40, %true : i1
    %42 = arith.extui %41 : i1 to i32
    %c0_i32_15 = arith.constant 0 : i32
    %43 = arith.cmpi ne, %42, %c0_i32_15 : i32
    scf.if %43 {
      %c0_19 = arith.constant 0 : index
      %c0_20 = arith.constant 0 : index
      %49 = vector.load %arg7[%c0_19, %c0_20] : memref<1x128xf32, #tpu.memory_space<vmem>>, vector<1x128xf32>
      %50 = arith.addf %49, %18 : vector<1x128xf32>
      %c0_21 = arith.constant 0 : index
      %c0_22 = arith.constant 0 : index
      %51 = vector.load %arg7[%c0_21, %c0_22] : memref<1x128xf32, #tpu.memory_space<vmem>>, vector<1x128xf32>
      tpu.vector_store %arg7[%c0_21, %c0_22], %50 {strides = array<i32>} : memref<1x128xf32, #tpu.memory_space<vmem>>, vector<1x128xf32>,
      %c0_23 = arith.constant 0 : index
      %c0_24 = arith.constant 0 : index
      %52 = vector.load %arg8[%c0_23, %c0_24] : memref<1x128xf32, #tpu.memory_space<vmem>>, vector<1x128xf32>
      %53 = arith.addf %52, %34 : vector<1x128xf32>
      %c0_25 = arith.constant 0 : index
      %c0_26 = arith.constant 0 : index
      %54 = vector.load %arg8[%c0_25, %c0_26] : memref<1x128xf32, #tpu.memory_space<vmem>>, vector<1x128xf32>
      tpu.vector_store %arg8[%c0_25, %c0_26], %53 {strides = array<i32>} : memref<1x128xf32, #tpu.memory_space<vmem>>, vector<1x128xf32>,
    } else {
    }
    %44 = arith.extui %40 : i1 to i32
    %c0_i32_16 = arith.constant 0 : i32
    %45 = arith.cmpi ne, %44, %c0_i32_16 : i32
    scf.if %45 {
      %c1_i32_19 = arith.constant 1 : i32
      %49 = arith.muli %36, %c1_i32_19 : i32
      %50 = tpu.iota {dimensions = array<i32: 0>} : vector<1x128xi32>
      %51 = vector.broadcast %49 : i32 to vector<1x128xi32>
      %52 = arith.addi %51, %50 : vector<1x128xi32>
      %53 = tpu.iota {dimensions = array<i32: 1>} : vector<1x128xi32>
      %c128_i32_20 = arith.constant 128 : i32
      %54 = vector.broadcast %c128_i32_20 : i32 to vector<1x128xi32>
      %55 = arith.muli %52, %54 : vector<1x128xi32>
      %56 = arith.addi %55, %53 : vector<1x128xi32>
      %c120_i32_21 = arith.constant 120 : i32
      %57 = vector.broadcast %c120_i32_21 : i32 to vector<1x128xi32>
      %58 = arith.cmpi slt, %56, %57 : vector<1x128xi32>
      %cst_22 = arith.constant 0.000000e+00 : f32
      %59 = vector.broadcast %cst_22 : f32 to vector<1x128xf32>
      %60 = arith.select %58, %18, %59 : vector<1x128xi1>, vector<1x128xf32>
      %cst_23 = arith.constant 0.000000e+00 : f32
      %61 = vector.broadcast %cst_23 : f32 to vector<1x128xf32>
      %62 = arith.select %58, %34, %61 : vector<1x128xi1>, vector<1x128xf32>
      %c0_24 = arith.constant 0 : index
      %c0_25 = arith.constant 0 : index
      %63 = vector.load %arg7[%c0_24, %c0_25] : memref<1x128xf32, #tpu.memory_space<vmem>>, vector<1x128xf32>
      %64 = arith.addf %63, %60 : vector<1x128xf32>
      %c0_26 = arith.constant 0 : index
      %c0_27 = arith.constant 0 : index
      %65 = vector.load %arg7[%c0_26, %c0_27] : memref<1x128xf32, #tpu.memory_space<vmem>>, vector<1x128xf32>
      tpu.vector_store %arg7[%c0_26, %c0_27], %64 {strides = array<i32>} : memref<1x128xf32, #tpu.memory_space<vmem>>, vector<1x128xf32>,
      %c0_28 = arith.constant 0 : index
      %c0_29 = arith.constant 0 : index
      %66 = vector.load %arg8[%c0_28, %c0_29] : memref<1x128xf32, #tpu.memory_space<vmem>>, vector<1x128xf32>
      %67 = arith.addf %66, %62 : vector<1x128xf32>
      %c0_30 = arith.constant 0 : index
      %c0_31 = arith.constant 0 : index
      %68 = vector.load %arg8[%c0_30, %c0_31] : memref<1x128xf32, #tpu.memory_space<vmem>>, vector<1x128xf32>
      tpu.vector_store %arg8[%c0_30, %c0_31], %67 {strides = array<i32>} : memref<1x128xf32, #tpu.memory_space<vmem>>, vector<1x128xf32>,
    } else {
    }
    %c0_i32_17 = arith.constant 0 : i32
    %46 = arith.cmpi eq, %arg1, %c0_i32_17 : i32
    %47 = arith.extui %46 : i1 to i32
    %c0_i32_18 = arith.constant 0 : i32
    %48 = arith.cmpi ne, %47, %c0_i32_18 : i32
    scf.if %48 {
      %c0_19 = arith.constant 0 : index
      %c0_20 = arith.constant 0 : index
      %49 = vector.load %arg7[%c0_19, %c0_20] : memref<1x128xf32, #tpu.memory_space<vmem>>, vector<1x128xf32>
      %50 = vector.shape_cast %49 : vector<1x128xf32> to vector<1x1x128xf32>
      %cst_21 = arith.constant dense<0.000000e+00> : vector<1xf32>
      %51 = vector.multi_reduction <add>, %50, %cst_21 [1, 2] : vector<1x1x128xf32> to vector<1xf32>
      %52 = vector.shape_cast %51 : vector<1xf32> to vector<1x1x1xf32>
      %53 = vector.extract %52[0, 0, 0] : f32 from vector<1x1x1xf32>
      %54 = vector.broadcast %53 : f32 to vector<1x1xf32>
      %cst_22 = arith.constant 0.00833333377 : f32
      %55 = vector.broadcast %cst_22 : f32 to vector<1x1xf32>
      %56 = arith.mulf %54, %55 : vector<1x1xf32>
      %57 = vector.shape_cast %56 : vector<1x1xf32> to vector<1x1x1xf32>
      %c0_23 = arith.constant 0 : index
      %c0_24 = arith.constant 0 : index
      %c0_25 = arith.constant 0 : index
      %58 = vector.load %arg5[%c0_23, %c0_24, %c0_25] : memref<1x1x1xf32, #tpu.memory_space<vmem>>, vector<1x1x1xf32>
      tpu.vector_store %arg5[%c0_23, %c0_24, %c0_25], %57 {strides = array<i32>} : memref<1x1x1xf32, #tpu.memory_space<vmem>>, vector<1x1x1xf32>,
      %c0_26 = arith.constant 0 : index
      %c0_27 = arith.constant 0 : index
      %59 = vector.load %arg8[%c0_26, %c0_27] : memref<1x128xf32, #tpu.memory_space<vmem>>, vector<1x128xf32>
      %60 = vector.shape_cast %59 : vector<1x128xf32> to vector<1x1x128xf32>
      %cst_28 = arith.constant dense<0.000000e+00> : vector<1xf32>
      %61 = vector.multi_reduction <add>, %60, %cst_28 [1, 2] : vector<1x1x128xf32> to vector<1xf32>
      %62 = vector.shape_cast %61 : vector<1xf32> to vector<1x1x1xf32>
      %63 = vector.extract %62[0, 0, 0] : f32 from vector<1x1x1xf32>
      %64 = vector.broadcast %63 : f32 to vector<1x1xf32>
      %cst_29 = arith.constant 0.00833333377 : f32
      %65 = vector.broadcast %cst_29 : f32 to vector<1x1xf32>
      %66 = arith.mulf %64, %65 : vector<1x1xf32>
      %67 = vector.shape_cast %66 : vector<1x1xf32> to vector<1x1x1xf32>
      %c0_30 = arith.constant 0 : index
      %c0_31 = arith.constant 0 : index
      %c0_32 = arith.constant 0 : index
      %68 = vector.load %arg6[%c0_30, %c0_31, %c0_32] : memref<1x1x1xf32, #tpu.memory_space<vmem>>, vector<1x1x1xf32>
      tpu.vector_store %arg6[%c0_30, %c0_31, %c0_32], %67 {strides = array<i32>} : memref<1x1x1xf32, #tpu.memory_space<vmem>>, vector<1x1x1xf32>,
    } else {
    }
    return
  }
  func.func @transform_0(%arg0: i32, %arg1: i32) -> (i32, i32) {
    %c1_i32 = arith.constant 1 : i32
    %0 = arith.muli %arg0, %c1_i32 : i32
    %1 = arith.addi %0, %arg1 : i32
    %c0_i32 = arith.constant 0 : i32
    %2 = arith.minsi %1, %c0_i32 : i32
    %c0_i32_0 = arith.constant 0 : i32
    %c0_i32_1 = arith.constant 0 : i32
    return %2, %c0_i32_0 : i32, i32
  }
  func.func @transform_1(%arg0: i32, %arg1: i32) -> (i32, i32) {
    %c1_i32 = arith.constant 1 : i32
    %0 = arith.muli %arg0, %c1_i32 : i32
    %1 = arith.addi %0, %arg1 : i32
    %c0_i32 = arith.constant 0 : i32
    %2 = arith.minsi %1, %c0_i32 : i32
    %c0_i32_0 = arith.constant 0 : i32
    %c0_i32_1 = arith.constant 0 : i32
    return %2, %c0_i32_0 : i32, i32
  }
  func.func @transform_2(%arg0: i32, %arg1: i32) -> (i32, i32) {
    %c1_i32 = arith.constant 1 : i32
    %0 = arith.muli %arg0, %c1_i32 : i32
    %1 = arith.addi %0, %arg1 : i32
    %c0_i32 = arith.constant 0 : i32
    %2 = arith.minsi %1, %c0_i32 : i32
    %c0_i32_0 = arith.constant 0 : i32
    %c0_i32_1 = arith.constant 0 : i32
    return %2, %c0_i32_0 : i32, i32
  }
  func.func @transform_3(%arg0: i32, %arg1: i32) -> (i32, i32, i32) {
    %c0_i32 = arith.constant 0 : i32
    %c0_i32_0 = arith.constant 0 : i32
    %c0_i32_1 = arith.constant 0 : i32
    return %arg0, %c0_i32, %c0_i32_0 : i32, i32, i32
  }
  func.func @transform_4(%arg0: i32, %arg1: i32) -> (i32, i32, i32) {
    %c0_i32 = arith.constant 0 : i32
    %c0_i32_0 = arith.constant 0 : i32
    %c0_i32_1 = arith.constant 0 : i32
    return %arg0, %c0_i32, %c0_i32_0 : i32, i32, i32
  }
}

</mosaic_0001>

<llo_original>
// kernel: tpu_custom_call.1
$region0: #{tpu_custom_call.1}
  #allocation0 [shape = 'u32[]', space=smem, size = 0x4, offset = 0x4, fixed_abs, tag = 'smem constant byte address 0x4 - core index']
  #allocation1 [shape = 'u32[72,128]{1,0:T(1,128)}', space=vmem, size = 0x9000, scoped, tag = 'internal scratch']
  #allocation2 [shape = 'f32[1,128]{1,0:T(1,128)}', space=vmem, size = 0x200, scoped, tag = 'scratch operand']
  #allocation3 [shape = 'f32[1,128]{1,0:T(1,128)}', space=vmem, size = 0x200, scoped, tag = 'scratch operand']
  %s0 = inlined_call_operand.hbm [shape: bf16[1,128], index: 0, kind: input, shape index: {}]
  %s1 = inlined_call_operand.hbm [shape: bf16[1,128], index: 1, kind: input, shape index: {}]
  %s2 = inlined_call_operand.vmem [shape: bf16[1,128], index: 2, kind: input, shape index: {}]
  %s3 = inlined_call_operand.vmem [shape: f32[2,1,1], index: 3, kind: output, shape index: {0}]
  %s4 = inlined_call_operand.vmem [shape: f32[2,1,1], index: 4, kind: output, shape index: {1}]
  %5 = xla_tuple %s3, %s4
  %s6 = sld [smem:[#allocation0]]
  $region77: #{tpu_custom_call.1} parent=0
    _
  %s8 = ssub.s32 1, %s6
  %s9 = scalar_select 0, %s8, %s6
  $region1: #{tpu_custom_call.1} parent=0
    #allocation4 [shape = 'u8[1024]{0}', space=vmem, size = 0x400, scoped, tag = 'input window, operand 0']
    #allocation5 [shape = 's32[2]{0}', space=sflag, size = 0x8, scoped, tag = 'scoped memory for tpu_custom_call.1']
    #allocation6 [shape = 'u8[1024]{0}', space=vmem, size = 0x400, scoped, tag = 'input window, operand 1']
    #allocation7 [shape = 's32[2]{0}', space=sflag, size = 0x8, scoped, tag = 'scoped memory for tpu_custom_call.1']
    %10 = vsyncpa [#allocation5], 0
    %s11 = scalar_lea.sflag [#allocation5], 1
    %12 = vsyncpa %s11, 0
    %13 = vsyncpa [#allocation7], 0
    %s14 = scalar_lea.sflag [#allocation7], 1
    %15 = vsyncpa %s14, 0
    loop: start=0, step=1, limit=4
    $region2: #{tpu_custom_call.1} parent=1 // loop_pre_header
      _
    $region3: #{tpu_custom_call.1} parent=1 // loop_header
      %s17 = sphi 0, %s21
      %p18 = scmp.ge.s32.totalorder %s17, 4
      %s24 = sphi 0, %s36
      %s25 = sphi 0, %s32
      %s26 = sphi 0, %s24
      %s27 = sphi 0, %s25
      %s28 = sphi 0, %s26
      %s29 = sphi 0, %s27
      %s45 = sphi 0, %s47
      %s48 = sphi 0, %s45
      %s49 = sphi 0, %s48
      %s65 = sphi 0, %s49
      %s77 = sphi 0, %s79
      %s80 = sphi 0, %s77
      %s81 = sphi 0, %s80
      %s97 = sphi 0, %s81
      %s109 = sphi 0, %s111
      %s112 = sphi 0, %s109
      %s113 = sphi 0, %s112
      %s129 = sphi 0, %s113
      %s135 = sphi 0, %s137
      %s138 = sphi 0, %s135
      %s139 = sphi 0, %s138
      %s155 = sphi 0, %s139
      %s161 = sphi 0, %s163
      %s164 = sphi 0, %s161
      %s165 = sphi 0, %s164
      %s181 = sphi 0, %s165
    $region4: #{tpu_custom_call.1} parent=1 // loop_header_branch
      %20 = sbr.rel (%p18) target = $region8
    $region5: #{tpu_custom_call.1} parent=1 // loop_body
      %s22 = ssub.s32 %s17, 1
      %s23 = ssub.s32 %s17, 2
      %s30 = sadd.s32 1, %s25
      %p31 = scmp.ge.s32.totalorder %s30, 1
      %s32 = scalar_select %p31, 0, %s30
      %s33 = sadd.s32 1, %s24
      %s34 = scalar_select %p31, %s33, %s24
      %p35 = scmp.ge.s32.totalorder %s34, 2
      %s36 = scalar_select %p35, 0, %s34
      %s37 = sadd.s32 %s24, %s25
      %p38 = scmp.lt.s32.totalorder %s37, 0
      %s39 = scalar_select %p38, %s37, 0
      %s40 = sadd.s32 %s36, %s32
      %p41 = scmp.lt.s32.totalorder %s40, 0
      %s42 = scalar_select %p41, %s40, 0
      %s43 = ssub.s32 %s39, %s42
      %p44 = scmp.eq.s32.totalorder %s43, 0
      %s46 = sadd.s32 %s45, 1
      %s47 = scalar_select %p44, %s45, %s46
      %p50 = pneg %p44
      %p51 = scmp.eq.s32.totalorder %s17, 1
      %p52 = por %p50, %p51
      %p53 = scmp.ne.s32.totalorder %s45, %s48
      %p54 = scmp.eq.s32.totalorder %s17, 0
      %p55 = por %p53, %p54
      %p56 = scmp.ne.s32.totalorder %s45, %s48
      %p57 = scmp.eq.s32.totalorder %s22, 1
      %p58 = por %p56, %p57
      %p59 = scmp.ne.s32.totalorder %s48, %s49
      %p60 = scmp.eq.s32.totalorder %s22, 0
      %p61 = por %p59, %p60
      %p62 = scmp.ne.s32.totalorder %s48, %s49
      %p63 = scmp.eq.s32.totalorder %s23, 1
      %p64 = por %p62, %p63
      %p66 = scmp.ne.s32.totalorder %s49, %s65
      %p67 = scmp.eq.s32.totalorder %s23, 0
      %p68 = por %p66, %p67
      %s69 = sadd.s32 %s24, %s25
      %p70 = scmp.lt.s32.totalorder %s69, 0
      %s71 = scalar_select %p70, %s69, 0
      %s72 = sadd.s32 %s36, %s32
      %p73 = scmp.lt.s32.totalorder %s72, 0
      %s74 = scalar_select %p73, %s72, 0
      %s75 = ssub.s32 %s71, %s74
      %p76 = scmp.eq.s32.totalorder %s75, 0
      %s78 = sadd.s32 %s77, 1
      %s79 = scalar_select %p76, %s77, %s78
      %p82 = pneg %p76
      %p83 = scmp.eq.s32.totalorder %s17, 1
      %p84 = por %p82, %p83
      %p85 = scmp.ne.s32.totalorder %s77, %s80
      %p86 = scmp.eq.s32.totalorder %s17, 0
      %p87 = por %p85, %p86
      %p88 = scmp.ne.s32.totalorder %s77, %s80
      %p89 = scmp.eq.s32.totalorder %s22, 1
      %p90 = por %p88, %p89
      %p91 = scmp.ne.s32.totalorder %s80, %s81
      %p92 = scmp.eq.s32.totalorder %s22, 0
      %p93 = por %p91, %p92
      %p94 = scmp.ne.s32.totalorder %s80, %s81
      %p95 = scmp.eq.s32.totalorder %s23, 1
      %p96 = por %p94, %p95
      %p98 = scmp.ne.s32.totalorder %s81, %s97
      %p99 = scmp.eq.s32.totalorder %s23, 0
      %p100 = por %p98, %p99
      %s101 = sadd.s32 %s24, %s25
      %p102 = scmp.lt.s32.totalorder %s101, 0
      %s103 = scalar_select %p102, %s101, 0
      %s104 = sadd.s32 %s36, %s32
      %p105 = scmp.lt.s32.totalorder %s104, 0
      %s106 = scalar_select %p105, %s104, 0
      %s107 = ssub.s32 %s103, %s106
      %p108 = scmp.eq.s32.totalorder %s107, 0
      %s110 = sadd.s32 %s109, 1
      %s111 = scalar_select %p108, %s109, %s110
      %p114 = pneg %p108
      %p115 = scmp.eq.s32.totalorder %s17, 1
      %p116 = por %p114, %p115
      %p117 = scmp.ne.s32.totalorder %s109, %s112
      %p118 = scmp.eq.s32.totalorder %s17, 0
      %p119 = por %p117, %p118
      %p120 = scmp.ne.s32.totalorder %s109, %s112
      %p121 = scmp.eq.s32.totalorder %s22, 1
      %p122 = por %p120, %p121
      %p123 = scmp.ne.s32.totalorder %s112, %s113
      %p124 = scmp.eq.s32.totalorder %s22, 0
      %p125 = por %p123, %p124
      %p126 = scmp.ne.s32.totalorder %s112, %s113
      %p127 = scmp.eq.s32.totalorder %s23, 1
      %p128 = por %p126, %p127
      %p130 = scmp.ne.s32.totalorder %s113, %s129
      %p131 = scmp.eq.s32.totalorder %s23, 0
      %p132 = por %p130, %p131
      %s133 = ssub.s32 %s24, %s36
      %p134 = scmp.eq.s32.totalorder %s133, 0
      %s136 = sadd.s32 %s135, 1
      %s137 = scalar_select %p134, %s135, %s136
      %p140 = pneg %p134
      %p141 = scmp.eq.s32.totalorder %s17, 1
      %p142 = por %p140, %p141
      %p143 = scmp.ne.s32.totalorder %s135, %s138
      %p144 = scmp.eq.s32.totalorder %s17, 0
      %p145 = por %p143, %p144
      %p146 = scmp.ne.s32.totalorder %s135, %s138
      %p147 = scmp.eq.s32.totalorder %s22, 1
      %p148 = por %p146, %p147
      %p149 = scmp.ne.s32.totalorder %s138, %s139
      %p150 = scmp.eq.s32.totalorder %s22, 0
      %p151 = por %p149, %p150
      %p152 = scmp.ne.s32.totalorder %s138, %s139
      %p153 = scmp.eq.s32.totalorder %s23, 1
      %p154 = por %p152, %p153
      %p156 = scmp.ne.s32.totalorder %s139, %s155
      %p157 = scmp.eq.s32.totalorder %s23, 0
      %p158 = por %p156, %p157
      %s159 = ssub.s32 %s24, %s36
      %p160 = scmp.eq.s32.totalorder %s159, 0
      %s162 = sadd.s32 %s161, 1
      %s163 = scalar_select %p160, %s161, %s162
      %p166 = pneg %p160
      %p167 = scmp.eq.s32.totalorder %s17, 1
      %p168 = por %p166, %p167
      %p169 = scmp.ne.s32.totalorder %s161, %s164
      %p170 = scmp.eq.s32.totalorder %s17, 0
      %p171 = por %p169, %p170
      %p172 = scmp.ne.s32.totalorder %s161, %s164
      %p173 = scmp.eq.s32.totalorder %s22, 1
      %p174 = por %p172, %p173
      %p175 = scmp.ne.s32.totalorder %s164, %s165
      %p176 = scmp.eq.s32.totalorder %s22, 0
      %p177 = por %p175, %p176
      %p178 = scmp.ne.s32.totalorder %s164, %s165
      %p179 = scmp.eq.s32.totalorder %s23, 1
      %p180 = por %p178, %p179
      %p182 = scmp.ne.s32.totalorder %s165, %s181
      %p183 = scmp.eq.s32.totalorder %s23, 0
      %p184 = por %p182, %p183
      %p185 = scmp.le.s32.totalorder 1, %s17
      %p186 = scmp.lt.s32.totalorder %s17, 3
      %p187 = pnand %p185, %p186
      %p188 = pneg %p187
      // Predicated region
      $region9: #{tpu_custom_call.1} parent=5 // pred_check
        _
      $region10: #{tpu_custom_call.1} parent=5 // pred_check_branch
        %190 = sbr.rel (%p187) target = $region12
      $region11: #{tpu_custom_call.1} parent=5 // pred_region
        %s191 = ssub.s32 %s17, 1
      $region12: #{tpu_custom_call.1} parent=5 // pred_fallthru
        _
      %p192 = scmp.lt.s32.totalorder %s17, 2
      // Predicated region
      $region13: #{tpu_custom_call.1} parent=5 // pred_check
        %p193 = pneg %p192
      $region14: #{tpu_custom_call.1} parent=5 // pred_check_branch
        %195 = sbr.rel (%p193) target = $region16
      $region15: #{tpu_custom_call.1} parent=5 // pred_region
        // Predicated region
        $region17: #{tpu_custom_call.1} parent=15 // pred_check
          %p196 = pneg %p55
        $region18: #{tpu_custom_call.1} parent=15 // pred_check_branch
          %198 = sbr.rel (%p196) target = $region20
        $region19: #{tpu_custom_call.1} parent=15 // pred_region
          %s199 = sand.u32 %s45, 1
          %s200 = scalar_lea.sflag [#allocation5], %s199
          %s201 = sand.u32 %s45, 1
          %s202 = scalar_lea.vmem [#allocation4], %s201
          %s203 = sadd.s32 %s24, %s25
          %p204 = scmp.lt.s32.totalorder %s203, 0
          %s205 = scalar_select %p204, %s203, 0
          %207 = vsyncadd %s200, 0
          %s208 = scalar_lea.hbm %s0, %s205
          %s210 = sshll.u32 %s208, 4
          %s211 = int_to_ptr.hbm [resolvable:$true] %s210
          %s212 = sshll.u32 %s202, 4
          %s213 = int_to_ptr.vmem [resolvable:$true] %s212
          %215 = dma.hbm_to_vmem [thread:$0]  %s211, 16, %s213, %s200
        $region20: #{tpu_custom_call.1} parent=15 // pred_fallthru
          _
        // Predicated region
        $region21: #{tpu_custom_call.1} parent=15 // pred_check
          %p216 = pneg %p87
        $region22: #{tpu_custom_call.1} parent=15 // pred_check_branch
          %218 = sbr.rel (%p216) target = $region24
        $region23: #{tpu_custom_call.1} parent=15 // pred_region
          %s219 = sand.u32 %s77, 1
          %s220 = scalar_lea.sflag [#allocation7], %s219
          %s221 = sand.u32 %s77, 1
          %s222 = scalar_lea.vmem [#allocation6], %s221
          %s223 = sadd.s32 %s24, %s25
          %p224 = scmp.lt.s32.totalorder %s223, 0
          %s225 = scalar_select %p224, %s223, 0
          %227 = vsyncadd %s220, 0
          %s228 = scalar_lea.hbm %s1, %s225
          %s230 = sshll.u32 %s228, 4
          %s231 = int_to_ptr.hbm [resolvable:$true] %s230
          %s232 = sshll.u32 %s222, 4
          %s233 = int_to_ptr.vmem [resolvable:$true] %s232
          %235 = dma.hbm_to_vmem [thread:$0]  %s231, 16, %s233, %s220
        $region24: #{tpu_custom_call.1} parent=15 // pred_fallthru
          _
        // Predicated region
        $region25: #{tpu_custom_call.1} parent=15 // pred_check
          %p236 = pneg %p119
        $region26: #{tpu_custom_call.1} parent=15 // pred_check_branch
          %238 = sbr.rel (%p236) target = $region28
        $region27: #{tpu_custom_call.1} parent=15 // pred_region
          %s239 = sadd.s32 %s24, %s25
          %p240 = scmp.lt.s32.totalorder %s239, 0
          %s241 = scalar_select %p240, %s239, 0
          %p242 = scmp.lt.s32.totalorder %s241, 0
          %s243 = scalar_select %p242, %s241, 0
          %s244 = scalar_lea.vmem %s2, %s243
          %s245 = sadd.s32 %s24, %s25
          %p246 = scmp.lt.s32.totalorder %s245, 0
          %s247 = scalar_select %p246, %s245, 0
        $region28: #{tpu_custom_call.1} parent=15 // pred_fallthru
          _
      $region16: #{tpu_custom_call.1} parent=5 // pred_fallthru
        _
      %p248 = scmp.le.s32.totalorder 1, %s17
      %p249 = scmp.lt.s32.totalorder %s17, 3
      %p250 = pnand %p248, %p249
      %p251 = pneg %p250
      // Predicated region
      $region29: #{tpu_custom_call.1} parent=5 // pred_check
        _
      $region30: #{tpu_custom_call.1} parent=5 // pred_check_branch
        %253 = sbr.rel (%p250) target = $region32
      $region31: #{tpu_custom_call.1} parent=5 // pred_region
        %s254 = ssub.s32 %s17, 1
        %s255 = sand.u32 %s48, 1
        %s256 = scalar_lea.sflag [#allocation5], %s255
        %s257 = sand.u32 %s48, 1
        %s258 = scalar_lea.vmem [#allocation4], %s257
        // Predicated region
        $region33: #{tpu_custom_call.1} parent=31 // pred_check
          %p259 = pneg %p61
        $region34: #{tpu_custom_call.1} parent=31 // pred_check_branch
          %261 = sbr.rel (%p259) target = $region36
        $region35: #{tpu_custom_call.1} parent=31 // pred_region
          %263 = dma.done %s256, 16
        $region36: #{tpu_custom_call.1} parent=31 // pred_fallthru
          _
        %s264 = sand.u32 %s80, 1
        %s265 = scalar_lea.sflag [#allocation7], %s264
        %s266 = sand.u32 %s80, 1
        %s267 = scalar_lea.vmem [#allocation6], %s266
        // Predicated region
        $region37: #{tpu_custom_call.1} parent=31 // pred_check
          %p268 = pneg %p93
        $region38: #{tpu_custom_call.1} parent=31 // pred_check_branch
          %270 = sbr.rel (%p268) target = $region40
        $region39: #{tpu_custom_call.1} parent=31 // pred_region
          %272 = dma.done %s265, 16
        $region40: #{tpu_custom_call.1} parent=31 // pred_fallthru
          _
        %s273 = sand.u32 %s48, 1
        %s274 = scalar_lea.sflag [#allocation5], %s273
        %s275 = sand.u32 %s48, 1
        %s276 = scalar_lea.vmem [#allocation4], %s275
        %p277 = pneg %p61
        %p278 = pneg %p58
        %s279 = sand.u32 %s80, 1
        %s280 = scalar_lea.sflag [#allocation7], %s279
        %s281 = sand.u32 %s80, 1
        %s282 = scalar_lea.vmem [#allocation6], %s281
        %p283 = pneg %p93
        %p284 = pneg %p90
        %s285 = sadd.s32 %s26, %s27
        %p286 = scmp.lt.s32.totalorder %s285, 0
        %s287 = scalar_select %p286, %s285, 0
        %p288 = scmp.lt.s32.totalorder %s287, 0
        %s289 = scalar_select %p288, %s287, 0
        %s290 = scalar_lea.vmem %s2, %s289
        %p291 = pneg %p125
        %p292 = pneg %p122
        %p293 = pneg %p151
        %p294 = pneg %p148
        %p295 = scmp.lt.s32.totalorder %s26, 1
        %s296 = scalar_select %p295, %s26, 1
        %s297 = scalar_lea.vmem %s3, %s296
        %p298 = pneg %p177
        %p299 = pneg %p174
        %p300 = scmp.lt.s32.totalorder %s26, 1
        %s301 = scalar_select %p300, %s26, 1
        %s302 = scalar_lea.vmem %s4, %s301
        %s303 = sadd.s32 %s26, %s27
        %p304 = scmp.lt.s32.totalorder %s303, 0
        %s305 = scalar_select %p304, %s303, 0
        %s306 = sadd.s32 %s26, %s27
        %p307 = scmp.lt.s32.totalorder %s306, 0
        %s308 = scalar_select %p307, %s306, 0
        %s309 = sadd.s32 %s26, %s27
        %p310 = scmp.lt.s32.totalorder %s309, 0
        %s311 = scalar_select %p310, %s309, 0
        %p312 = scmp.lt.s32.totalorder %s311, 0
        %s313 = scalar_select %p312, %s311, 0
        %s314 = scalar_lea.vmem %s2, %s313
        %s315 = sadd.s32 %s26, %s27
        %p316 = scmp.lt.s32.totalorder %s315, 0
        %s317 = scalar_select %p316, %s315, 0
        %p318 = scmp.lt.s32.totalorder %s26, 1
        %s319 = scalar_select %p318, %s26, 1
        %s320 = scalar_lea.vmem %s3, %s319
        %p321 = scmp.lt.s32.totalorder %s26, 1
        %s322 = scalar_select %p321, %s26, 1
        %s323 = scalar_lea.vmem %s4, %s322
        %p324 = scmp.eq.s32.totalorder %s27, 0
        // Predicated region
        $region41: #{tpu_custom_call.1} parent=31 // pred_check
          %p325 = pneg %p324
        $region42: #{tpu_custom_call.1} parent=31 // pred_check_branch
          %327 = sbr.rel (%p325) target = $region44
        $region43: #{tpu_custom_call.1} parent=31 // pred_region
          %328 = vst [vmem:[#allocation2] sm:$0x1] 0.0
          %329 = vst [vmem:[#allocation3] sm:$0x1] 0.0
        $region44: #{tpu_custom_call.1} parent=31 // pred_fallthru
          _
        %v330 = vld [vmem:[%s258] sm:$0x1]
        %v331 = vunpack.c.l.bf16 %v330
        %v332 = vld [vmem:[%s267] sm:$0x1]
        %v333 = vunpack.c.l.bf16 %v332
        %v334 = vld [vmem:[%s314] sm:$0x1]
        %v335 = vunpack.c.l.bf16 %v334
        %v336 = vand.u32 2147483647, %v331
        %v337 = vsub.f32 0.0, %v336
        %v338 = vmul.f32 %v337, 1.442695
        %v339 = vpow.pop %v338
        %v340 = vmax.f32 %v331, 0.0
        %v341 = vadd.f32 %v339, 1.0
        %v342 = vlog2.pop %v341
        %v343 = vmul.f32 %v342, 0.6931472
        %v344 = vmul.f32 -0.5, %v339
        %v345 = vadd.f32 %v344, 1.0
        %v346 = vmul.f32 %v345, %v339
        %v347 = vand.u32 2147483647, %v339
        %vm348 = vcmp.lt.f32.partialorder %v347, 0.0004427343
        %v349 = vsel %vm348, %v346, %v343
        %v350 = vadd.f32 %v340, %v349
        %v351 = vmul.f32 %v333, %v331
        %v352 = vsub.f32 %v350, %v351
        %v353 = vadd.f32 %v339, 1.0
        %v354 = vrcp.pop %v353
        %v355 = vmul.f32 %v353, %v354
        %v356 = vsub.f32 1.0, %v355
        %v357 = vmul.f32 %v354, %v356
        %v358 = vadd.f32 %v354, %v357
        %vm359 = vweird.f32 %v353
        %vm360 = vweird.f32 %v354
        %vm361 = vmor %vm359, %vm360
        %v362 = vsel %vm361, %v354, %v358
        %v363 = vand.u32 2147483647, %v353
        %vm364 = vcmp.eq.f32.partialorder %v363, 8.507059e+37
        %v365 = vand.u32 %v353, 2147483648
        %v366 = vor.u32 1.1754944e-38, %v365
        %v367 = vsel %vm364, %v366, %v362
        %vm368 = vcmp.ge.f32.partialorder %v331, 0.0
        %v369 = vsel %vm368, 1.0, %v339
        %v370 = vmul.f32 %v367, %v369
        %v371 = vmax.f32 %v370, 0.0001
        %v372 = vmin.f32 %v371, 0.9999
        %v373 = vsub.f32 0.0, %v335
        %v374 = vmul.f32 %v373, %v372
        %v375 = vadd.f32 %v374, 1.0
        %v376 = vlog2.pop %v375
        %v377 = vmul.f32 %v376, 0.6931472
        %v378 = vmul.f32 -0.5, %v374
        %v379 = vadd.f32 %v378, 1.0
        %v380 = vmul.f32 %v379, %v374
        %v381 = vand.u32 2147483647, %v374
        %vm382 = vcmp.lt.f32.partialorder %v381, 0.0004427343
        %v383 = vsel %vm382, %v380, %v377
        %s384 = sadd.s32 %s26, %s27
        %s385 = sadd.s32 %s384, 1
        %s386 = smul.u32 %s385, 128
        %p387 = scmp.gt.s32.totalorder %s386, 120
        %p388 = scmp.le.s32.totalorder %s386, 120
        // Predicated region
        $region45: #{tpu_custom_call.1} parent=31 // pred_check
          %p389 = pneg %p388
        $region46: #{tpu_custom_call.1} parent=31 // pred_check_branch
          %391 = sbr.rel (%p389) target = $region48
        $region47: #{tpu_custom_call.1} parent=31 // pred_region
          %v392 = vld [vmem:[#allocation2] sm:$0x1]
          %v393 = vadd.f32 %v392, %v352
          %394 = vst [vmem:[#allocation2] sm:$0x1] %v393
          %v395 = vld [vmem:[#allocation3] sm:$0x1]
          %v396 = vadd.f32 %v395, %v383
          %397 = vst [vmem:[#allocation3] sm:$0x1] %v396
        $region48: #{tpu_custom_call.1} parent=31 // pred_fallthru
          _
        // Predicated region
        $region49: #{tpu_custom_call.1} parent=31 // pred_check
          %p398 = pneg %p387
        $region50: #{tpu_custom_call.1} parent=31 // pred_check_branch
          %400 = sbr.rel (%p398) target = $region52
        $region51: #{tpu_custom_call.1} parent=31 // pred_region
          %v401 = vlaneseq
          %v402 = vshrl.u32 %v401, 7
          %v403 = vstv %s384
          %v404 = vadd.s32 %v403, %v402
          %v405 = vlaneseq
          %v406 = vand.u32 %v405, 127
          %v407 = vmul.u32 %v404, 128
          %v408 = vadd.s32 %v407, %v406
          %vm409 = vcmp.lt.s32.totalorder %v408, 120
          %v410 = vsel %vm409, %v352, 0.0
          %v411 = vsel %vm409, %v383, 0.0
          %v412 = vld [vmem:[#allocation2] sm:$0x1]
          %v413 = vadd.f32 %v412, %v410
          %414 = vst [vmem:[#allocation2] sm:$0x1] %v413
          %v415 = vld [vmem:[#allocation3] sm:$0x1]
          %v416 = vadd.f32 %v415, %v411
          %417 = vst [vmem:[#allocation3] sm:$0x1] %v416
        $region52: #{tpu_custom_call.1} parent=31 // pred_fallthru
          _
        // Predicated region
        $region53: #{tpu_custom_call.1} parent=31 // pred_check
          %p418 = pneg %p324
        $region54: #{tpu_custom_call.1} parent=31 // pred_check_branch
          %420 = sbr.rel (%p418) target = $region56
        $region55: #{tpu_custom_call.1} parent=31 // pred_region
          %v421 = vld [vmem:[#allocation2] sm:$0x1]
          %vm422 = vcmask 1040384
          %v423 = vsel %vm422, %v421, 0.0
          %424 = vadd.xlane.f32.xlu0 %v423
          %v425 = vpop.xlane.xlu0 %424
          %v426 = vrot.slane %v425, 4
          %v427 = vadd.f32 %v425, %v426
          %v428 = vrot.slane %v427, 2
          %v429 = vadd.f32 %v427, %v428
          %v430 = vrot.slane %v429, 1
          %v431 = vadd.f32 %v429, %v430
          %s432 = vtos %v431
          %v433 = vstv %s432
          %v434 = vmul.f32 %v433, 0.008333334
          %vm435 = vcmask 0
          %436 = vst.msk [vmem:[%s320] sm:$0x1] %vm435, %v434
          %v437 = vld [vmem:[#allocation3] sm:$0x1]
          %v438 = vsel %vm422, %v437, 0.0
          %439 = vadd.xlane.f32.xlu0 %v438
          %v440 = vpop.xlane.xlu0 %439
          %v441 = vrot.slane %v440, 4
          %v442 = vadd.f32 %v440, %v441
          %v443 = vrot.slane %v442, 2
          %v444 = vadd.f32 %v442, %v443
          %v445 = vrot.slane %v444, 1
          %v446 = vadd.f32 %v444, %v445
          %s447 = vtos %v446
          %v448 = vstv %s447
          %v449 = vmul.f32 %v448, 0.008333334
          %450 = vst.msk [vmem:[%s323] sm:$0x1] %vm435, %v449
        $region56: #{tpu_custom_call.1} parent=31 // pred_fallthru
          _
        %p451 = scmp.lt.s32.totalorder %s26, 1
        %s452 = scalar_select %p451, %s26, 1
        %s453 = scalar_lea.vmem %s3, %s452
        %p454 = scmp.lt.s32.totalorder %s26, 1
        %s455 = scalar_select %p454, %s26, 1
        %s456 = scalar_lea.vmem %s4, %s455
        // Predicated region
        $region57: #{tpu_custom_call.1} parent=31 // pred_check
          %p457 = pneg %p148
        $region58: #{tpu_custom_call.1} parent=31 // pred_check_branch
          %459 = sbr.rel (%p457) target = $region60
        $region59: #{tpu_custom_call.1} parent=31 // pred_region
          _
        $region60: #{tpu_custom_call.1} parent=31 // pred_fallthru
          _
        // Predicated region
        $region61: #{tpu_custom_call.1} parent=31 // pred_check
          %p460 = pneg %p174
        $region62: #{tpu_custom_call.1} parent=31 // pred_check_branch
          %462 = sbr.rel (%p460) target = $region64
        $region63: #{tpu_custom_call.1} parent=31 // pred_region
          _
        $region64: #{tpu_custom_call.1} parent=31 // pred_fallthru
          _
      $region32: #{tpu_custom_call.1} parent=5 // pred_fallthru
        _
      %p463 = scmp.le.s32.totalorder 2, %s17
      // Predicated region
      $region65: #{tpu_custom_call.1} parent=5 // pred_check
        %p464 = pneg %p463
      $region66: #{tpu_custom_call.1} parent=5 // pred_check_branch
        %466 = sbr.rel (%p464) target = $region68
      $region67: #{tpu_custom_call.1} parent=5 // pred_region
        %s467 = ssub.s32 %s17, 2
        // Predicated region
        $region69: #{tpu_custom_call.1} parent=67 // pred_check
          %p468 = pneg %p154
        $region70: #{tpu_custom_call.1} parent=67 // pred_check_branch
          %470 = sbr.rel (%p468) target = $region72
        $region71: #{tpu_custom_call.1} parent=67 // pred_region
          %p471 = scmp.lt.s32.totalorder %s28, 1
          %s472 = scalar_select %p471, %s28, 1
          %s473 = scalar_lea.vmem %s3, %s472
        $region72: #{tpu_custom_call.1} parent=67 // pred_fallthru
          _
        // Predicated region
        $region73: #{tpu_custom_call.1} parent=67 // pred_check
          %p474 = pneg %p180
        $region74: #{tpu_custom_call.1} parent=67 // pred_check_branch
          %476 = sbr.rel (%p474) target = $region76
        $region75: #{tpu_custom_call.1} parent=67 // pred_region
          %p477 = scmp.lt.s32.totalorder %s28, 1
          %s478 = scalar_select %p477, %s28, 1
          %s479 = scalar_lea.vmem %s4, %s478
        $region76: #{tpu_custom_call.1} parent=67 // pred_fallthru
          _
      $region68: #{tpu_custom_call.1} parent=5 // pred_fallthru
        _
    $region6: #{tpu_custom_call.1} parent=1 // loop_footer
      %s21 = sadd.s32 1, %s17
    $region7: #{tpu_custom_call.1} parent=1 // loop_footer_branch
      %16 = sbr.rel target = $region3
    $region8: #{tpu_custom_call.1} parent=1 // loop_exit
      _
    %480 = vsyncpa [#allocation5], 1
    %s481 = scalar_lea.sflag [#allocation5], 1
    %482 = vsyncpa %s481, 1
    %483 = vsyncpa [#allocation7], 1
    %s484 = scalar_lea.sflag [#allocation7], 1
    %485 = vsyncpa %s484, 1

</llo_original>
